<compile_context>
chip_gen: v7x
topology: tpu7x:2x2x1
jax: 0.10.0
libtpu: 0.0.40
codegen_flags: <defaults>
</compile_context>

<pallas_src>
from math import comb

import jax
import jax.numpy as jnp
from jax.experimental import pallas as pl
from jax.experimental.pallas import tpu as pltpu


def _spline_pp_form(knots, n_ctrl, order):
    """Run the Cox-de Boor recursion symbolically (knots are compile-time
    Python floats) and return the piecewise-polynomial form of the spline.

    Returns:
      span_left : left knot of every non-degenerate knot span (python floats,
                  increasing).
      A         : list of n_spans*order rows, each a list of n_ctrl python
                  floats.  Horner coefficient m of span s (for powers of
                  dx = x - span_left[s]) is row s*order + m dotted with c.
      a_end     : list of n_ctrl python floats; basis values at x == t[-1]
                  under the reference's endpoint patch.
    """
    t = [float(v) for v in knots]
    k = order - 1
    i_special = len(t) - order - 1
    cache = {}

    def poly_x(d, i, j):
        """Power-basis-in-x coefficients of N_{i,d} restricted to the
        degree-0 knot span j (indicator_j == 1, all other indicators 0)."""
        key = (d, i, j)
        if key in cache:
            return cache[key]
        if d == 0:
            out = [1.0 if i == j else 0.0]
        else:
            out = [0.0] * (d + 1)
            if t[i + d] != t[i]:                       # first term (x - t[i]) / (t[i+d] - t[i])
                inv = 1.0 / (t[i + d] - t[i])
                b = poly_x(d - 1, i, j)
                for m, bm in enumerate(b):
                    out[m + 1] += bm * inv
                    out[m] -= bm * t[i] * inv
            if t[i + d + 1] != t[i + 1]:               # second term (t[i+d+1] - x) / (t[i+d+1] - t[i+1])
                inv = 1.0 / (t[i + d + 1] - t[i + 1])
                b = poly_x(d - 1, i + 1, j)
                for m, bm in enumerate(b):
                    out[m + 1] -= bm * inv
                    out[m] += bm * t[i + d + 1] * inv
        cache[key] = out
        return out

    def shift(coeffs, b):
        """Rebase power-basis-in-x coefficients to powers of dx = x - b."""
        out = [0.0] * len(coeffs)
        for jd, aj in enumerate(coeffs):
            if aj == 0.0:
                continue
            for m in range(jd + 1):
                out[m] += aj * comb(jd, m) * (b ** (jd - m))
        return out

    spans = [(j, t[j]) for j in range(len(t) - 1) if t[j] < t[j + 1]]
    span_left = [left for _, left in spans]

    A = []
    for j, left in spans:
        polys = [shift(poly_x(k, i, j), left) for i in range(n_ctrl)]
        for m in range(order):
            A.append([polys[i][m] for i in range(n_ctrl)])

    a_end = [0.0] * n_ctrl
    if 0 <= i_special < len(t) - 1:
        for i in range(n_ctrl):
            p = poly_x(k, i, i_special)
            a_end[i] = sum(cm * (t[-1] ** m) for m, cm in enumerate(p))

    return span_left, A, a_end


def make_spline_kernel(knots_tuple, n_ctrl, order):
    """Build the Pallas kernel for fixed (compile-time) knots / order."""
    span_left, A, a_end = _spline_pp_form(knots_tuple, n_ctrl, order)
    n_spans = len(span_left)
    t_first = float(knots_tuple[0])
    t_last = float(knots_tuple[-1])

    def kernel(p_ref, x_ref, y_ref):
        # p_ref : SMEM (n_spans*order + 1,) f32 = [span-major Horner coeffs | endpoint value]
        # x_ref : VMEM (block_rows, 128) evaluation points
        # y_ref : VMEM (block_rows, 128) spline values
        x = x_ref[...]
        y_end = p_ref[n_spans * order]

        if n_spans == 0:
            # Degenerate knot vector (all knots equal): zero except endpoint patch.
            y_ref[...] = jnp.where(x == t_last, y_end, 0.0)
            return

        # Hoist every SMEM scalar read once, off the vector path.
        coef = [[p_ref[s * order + m] for m in range(order)] for s in range(n_spans)]

        # Span selection: one (x >= knot) compare per interior breakpoint,
        # reused for the left-edge select and all `order` coefficient selects.
        sel = list(coef[0])
        left = span_left[0]
        for s in range(1, n_spans):
            ge = x >= span_left[s]
            left = jnp.where(ge, span_left[s], left)
            for m in range(order):
                sel[m] = jnp.where(ge, coef[s][m], sel[m])

        # Horner in the local coordinate of the selected span.
        dx = x - left
        y = sel[order - 1]
        for m in range(order - 2, -1, -1):
            y = y * dx + sel[m]

        in_dom = jnp.logical_and(x >= t_first, x < t_last)
        y = jnp.where(in_dom, y, 0.0)
        y = jnp.where(x == t_last, y_end, y)   # reference's endpoint special case
        y_ref[...] = y

    return kernel, A, a_end


def spline_forward(x, control_points, knots, order, *, block_rows=1024, lanes=128):
    """Pallas-backed equivalent of Spline.forward for 1-D x (any length N)."""
    n = int(x.shape[0])
    n_ctrl = int(control_points.shape[0])
    knots_tuple = tuple(float(v) for v in knots)

    kernel, A, a_end = make_spline_kernel(knots_tuple, n_ctrl, order)

    # Per-span Horner coefficients + endpoint value: tiny constant-matrix @ c
    # in plain JAX, shipped to SMEM as scalars.
    c = control_points.astype(jnp.float32)
    if A:
        coeffs = jnp.asarray(A, dtype=jnp.float32) @ c              # (n_spans*order,)
    else:
        coeffs = jnp.zeros((0,), jnp.float32)
    y_end = jnp.asarray(a_end, dtype=jnp.float32) @ c                # scalar
    params = jnp.concatenate([coeffs, y_end[None]])

    xf = x.astype(jnp.float32)
    n128 = -(-n // lanes) * lanes
    if n128 != n:
        # TODO(synk): <=127-element tail pad; only hit when N % 128 != 0.
        xf = jnp.pad(xf, (0, n128 - n))
    rows = n128 // lanes
    x2 = xf.reshape(rows, lanes)               # layout-only change, no pad/slice

    # Tile sizing: fixed 512-1024-row blocks for big inputs (grid grows, >=4
    # pipelined steps hide the DMA); small inputs are one full-array block.
    # A ragged final block is fine (OOB stores are dropped by Pallas).
    if rows <= block_rows:
        br = rows
    else:
        target = 1024 if rows >= 4096 else 512
        br = max(8, (min(block_rows, target) // 8) * 8)
    grid = -(-rows // br)

    y2 = pl.pallas_call(
        kernel,
        out_shape=jax.ShapeDtypeStruct((rows, lanes), jnp.float32),
        grid=(grid,),
        in_specs=[
            pl.BlockSpec(memory_space=pltpu.MemorySpace.SMEM),      # pp coefficients
            pl.BlockSpec((br, lanes), lambda r: (r, 0)),            # x tile
        ],
        out_specs=pl.BlockSpec((br, lanes), lambda r: (r, 0)),
        compiler_params=pltpu.CompilerParams(dimension_semantics=("parallel",)),
    )(params, x2)

    y = y2.reshape(n128)
    return y if n128 == n else y[:n]


def spline_reference(x, control_points, knots, order):
    """Independent pure-JAX transcription of the PyTorch recursion (with divides)."""
    t = [float(v) for v in knots]
    n_t = len(t)
    k = order - 1

    def basis(xv, d, i):
        if d == 0:
            a = jnp.where(jnp.logical_and(t[i] <= xv, xv < t[i + 1]), 1.0, 0.0)
            if i == n_t - order - 1:
                a = jnp.where(xv == t[-1], 1.0, a)
            return a
        if t[i + d] == t[i]:
            c1 = jnp.zeros_like(xv)
        else:
            c1 = (xv - t[i]) / (t[i + d] - t[i]) * basis(xv, d - 1, i)
        if t[i + d + 1] == t[i + 1]:
            c2 = jnp.zeros_like(xv)
        else:
            c2 = (t[i + d + 1] - xv) / (t[i + d + 1] - t[i + 1]) * basis(xv, d - 1, i + 1)
        return c1 + c2

    n_ctrl = int(control_points.shape[0])
    B = jnp.stack([basis(x, k, i) for i in range(n_ctrl)], axis=1)
    return (B * control_points[None, :]).sum(axis=1)


if __name__ == "__main__":
    order = 4  # cubic spline (degree k = 3)

    # Clamped knot vector on [0, 1]; len(knots) = n_ctrl + order.
    knots = jnp.array([0.0] * order + [0.25, 0.5, 0.75] + [1.0] * order,
                      dtype=jnp.float32)
    n_ctrl = knots.shape[0] - order  # 7 control points

    key = jax.random.PRNGKey(0)
    kc, kx = jax.random.split(key)
    control_points = jax.random.normal(kc, (n_ctrl,), dtype=jnp.float32)

    N = 2048
    x = jax.random.uniform(kx, (N,), dtype=jnp.float32)
    # exercise both endpoints (incl. x == t[-1] special case), an interior
    # knot, and out-of-domain points on both sides
    x = x.at[0].set(0.0).at[1].set(1.0).at[2].set(0.5).at[3].set(1.5).at[4].set(-0.5)

    y = spline_forward(x, control_points, knots, order)
    y = jax.block_until_ready(y)

    y_ref = spline_reference(x, control_points, knots, order)

    assert y.shape == (N,) and y.dtype == jnp.float32
    assert jnp.allclose(y, y_ref, atol=1e-5, rtol=1e-5), "kernel mismatch vs reference"
    print("KERNEL_OK")
</pallas_src>

<mosaic_0001>
module attributes {stable_mosaic.version = 11 : i64} {
  func.func @kernel(%arg0: i32, %arg1: memref<17xf32, #tpu.memory_space<smem>>, %arg2: memref<16x128xf32, #tpu.memory_space<vmem>>, %arg3: memref<16x128xf32, #tpu.memory_space<vmem>>) attributes {dimension_semantics = [#tpu.dimension_semantics<parallel>], iteration_bounds = array<i64: 1>, scalar_prefetch = 0 : i64, scratch_operands = 0 : i64, tpu.core_type = #tpu.core_type<tc>, window_params = [{transform_indices = @transform_0, window_bounds = array<i64: 17>}, {transform_indices = @transform_1, window_bounds = array<i64: 16, 128>}, {transform_indices = @transform_2, window_bounds = array<i64: 16, 128>}]} {
    %c0 = arith.constant 0 : index
    %c0_0 = arith.constant 0 : index
    %0 = vector.load %arg2[%c0, %c0_0] : memref<16x128xf32, #tpu.memory_space<vmem>>, vector<16x128xf32>
    %c16 = arith.constant 16 : index
    %1 = memref.load %arg1[%c16] : memref<17xf32, #tpu.memory_space<smem>>
    %c0_1 = arith.constant 0 : index
    %2 = memref.load %arg1[%c0_1] : memref<17xf32, #tpu.memory_space<smem>>
    %c1 = arith.constant 1 : index
    %3 = memref.load %arg1[%c1] : memref<17xf32, #tpu.memory_space<smem>>
    %c2 = arith.constant 2 : index
    %4 = memref.load %arg1[%c2] : memref<17xf32, #tpu.memory_space<smem>>
    %c3 = arith.constant 3 : index
    %5 = memref.load %arg1[%c3] : memref<17xf32, #tpu.memory_space<smem>>
    %c4 = arith.constant 4 : index
    %6 = memref.load %arg1[%c4] : memref<17xf32, #tpu.memory_space<smem>>
    %c5 = arith.constant 5 : index
    %7 = memref.load %arg1[%c5] : memref<17xf32, #tpu.memory_space<smem>>
    %c6 = arith.constant 6 : index
    %8 = memref.load %arg1[%c6] : memref<17xf32, #tpu.memory_space<smem>>
    %c7 = arith.constant 7 : index
    %9 = memref.load %arg1[%c7] : memref<17xf32, #tpu.memory_space<smem>>
    %c8 = arith.constant 8 : index
    %10 = memref.load %arg1[%c8] : memref<17xf32, #tpu.memory_space<smem>>
    %c9 = arith.constant 9 : index
    %11 = memref.load %arg1[%c9] : memref<17xf32, #tpu.memory_space<smem>>
    %c10 = arith.constant 10 : index
    %12 = memref.load %arg1[%c10] : memref<17xf32, #tpu.memory_space<smem>>
    %c11 = arith.constant 11 : index
    %13 = memref.load %arg1[%c11] : memref<17xf32, #tpu.memory_space<smem>>
    %c12 = arith.constant 12 : index
    %14 = memref.load %arg1[%c12] : memref<17xf32, #tpu.memory_space<smem>>
    %c13 = arith.constant 13 : index
    %15 = memref.load %arg1[%c13] : memref<17xf32, #tpu.memory_space<smem>>
    %c14 = arith.constant 14 : index
    %16 = memref.load %arg1[%c14] : memref<17xf32, #tpu.memory_space<smem>>
    %c15 = arith.constant 15 : index
    %17 = memref.load %arg1[%c15] : memref<17xf32, #tpu.memory_space<smem>>
    %cst = arith.constant 2.500000e-01 : f32
    %18 = vector.broadcast %cst : f32 to vector<16x128xf32>
    %19 = arith.cmpf oge, %0, %18 : vector<16x128xf32>
    %cst_2 = arith.constant 2.500000e-01 : f32
    %cst_3 = arith.constant 0.000000e+00 : f32
    %20 = vector.broadcast %cst_2 : f32 to vector<16x128xf32>
    %21 = vector.broadcast %cst_3 : f32 to vector<16x128xf32>
    %22 = arith.select %19, %20, %21 : vector<16x128xi1>, vector<16x128xf32>
    %23 = vector.broadcast %6 : f32 to vector<16x128xf32>
    %24 = vector.broadcast %2 : f32 to vector<16x128xf32>
    %25 = arith.select %19, %23, %24 : vector<16x128xi1>, vector<16x128xf32>
    %26 = vector.broadcast %7 : f32 to vector<16x128xf32>
    %27 = vector.broadcast %3 : f32 to vector<16x128xf32>
    %28 = arith.select %19, %26, %27 : vector<16x128xi1>, vector<16x128xf32>
    %29 = vector.broadcast %8 : f32 to vector<16x128xf32>
    %30 = vector.broadcast %4 : f32 to vector<16x128xf32>
    %31 = arith.select %19, %29, %30 : vector<16x128xi1>, vector<16x128xf32>
    %32 = vector.broadcast %9 : f32 to vector<16x128xf32>
    %33 = vector.broadcast %5 : f32 to vector<16x128xf32>
    %34 = arith.select %19, %32, %33 : vector<16x128xi1>, vector<16x128xf32>
    %cst_4 = arith.constant 5.000000e-01 : f32
    %35 = vector.broadcast %cst_4 : f32 to vector<16x128xf32>
    %36 = arith.cmpf oge, %0, %35 : vector<16x128xf32>
    %cst_5 = arith.constant 5.000000e-01 : f32
    %37 = vector.broadcast %cst_5 : f32 to vector<16x128xf32>
    %38 = arith.select %36, %37, %22 : vector<16x128xi1>, vector<16x128xf32>
    %39 = vector.broadcast %10 : f32 to vector<16x128xf32>
    %40 = arith.select %36, %39, %25 : vector<16x128xi1>, vector<16x128xf32>
    %41 = vector.broadcast %11 : f32 to vector<16x128xf32>
    %42 = arith.select %36, %41, %28 : vector<16x128xi1>, vector<16x128xf32>
    %43 = vector.broadcast %12 : f32 to vector<16x128xf32>
    %44 = arith.select %36, %43, %31 : vector<16x128xi1>, vector<16x128xf32>
    %45 = vector.broadcast %13 : f32 to vector<16x128xf32>
    %46 = arith.select %36, %45, %34 : vector<16x128xi1>, vector<16x128xf32>
    %cst_6 = arith.constant 7.500000e-01 : f32
    %47 = vector.broadcast %cst_6 : f32 to vector<16x128xf32>
    %48 = arith.cmpf oge, %0, %47 : vector<16x128xf32>
    %cst_7 = arith.constant 7.500000e-01 : f32
    %49 = vector.broadcast %cst_7 : f32 to vector<16x128xf32>
    %50 = arith.select %48, %49, %38 : vector<16x128xi1>, vector<16x128xf32>
    %51 = vector.broadcast %14 : f32 to vector<16x128xf32>
    %52 = arith.select %48, %51, %40 : vector<16x128xi1>, vector<16x128xf32>
    %53 = vector.broadcast %15 : f32 to vector<16x128xf32>
    %54 = arith.select %48, %53, %42 : vector<16x128xi1>, vector<16x128xf32>
    %55 = vector.broadcast %16 : f32 to vector<16x128xf32>
    %56 = arith.select %48, %55, %44 : vector<16x128xi1>, vector<16x128xf32>
    %57 = vector.broadcast %17 : f32 to vector<16x128xf32>
    %58 = arith.select %48, %57, %46 : vector<16x128xi1>, vector<16x128xf32>
    %59 = arith.subf %0, %50 : vector<16x128xf32>
    %60 = arith.mulf %58, %59 : vector<16x128xf32>
    %61 = arith.addf %60, %56 : vector<16x128xf32>
    %62 = arith.mulf %61, %59 : vector<16x128xf32>
    %63 = arith.addf %62, %54 : vector<16x128xf32>
    %64 = arith.mulf %63, %59 : vector<16x128xf32>
    %65 = arith.addf %64, %52 : vector<16x128xf32>
    %cst_8 = arith.constant 0.000000e+00 : f32
    %66 = vector.broadcast %cst_8 : f32 to vector<16x128xf32>
    %67 = arith.cmpf oge, %0, %66 : vector<16x128xf32>
    %cst_9 = arith.constant 1.000000e+00 : f32
    %68 = vector.broadcast %cst_9 : f32 to vector<16x128xf32>
    %69 = arith.cmpf olt, %0, %68 : vector<16x128xf32>
    %70 = arith.andi %67, %69 : vector<16x128xi1>
    %cst_10 = arith.constant 0.000000e+00 : f32
    %71 = vector.broadcast %cst_10 : f32 to vector<16x128xf32>
    %72 = arith.select %70, %65, %71 : vector<16x128xi1>, vector<16x128xf32>
    %cst_11 = arith.constant 1.000000e+00 : f32
    %73 = vector.broadcast %cst_11 : f32 to vector<16x128xf32>
    %74 = arith.cmpf oeq, %0, %73 : vector<16x128xf32>
    %75 = vector.broadcast %1 : f32 to vector<16x128xf32>
    %76 = arith.select %74, %75, %72 : vector<16x128xi1>, vector<16x128xf32>
    %c0_12 = arith.constant 0 : index
    %c0_13 = arith.constant 0 : index
    %77 = vector.load %arg3[%c0_12, %c0_13] : memref<16x128xf32, #tpu.memory_space<vmem>>, vector<16x128xf32>
    tpu.vector_store %arg3[%c0_12, %c0_13], %76 {strides = array<i32>} : memref<16x128xf32, #tpu.memory_space<vmem>>, vector<16x128xf32>,
    return
  }
  func.func @transform_0(%arg0: i32) -> i32 {
    %c0_i32 = arith.constant 0 : i32
    %c0_i32_0 = arith.constant 0 : i32
    return %c0_i32 : i32
  }
  func.func @transform_1(%arg0: i32) -> (i32, i32) {
    %c0_i32 = arith.constant 0 : i32
    %c0_i32_0 = arith.constant 0 : i32
    return %arg0, %c0_i32 : i32, i32
  }
  func.func @transform_2(%arg0: i32) -> (i32, i32) {
    %c0_i32 = arith.constant 0 : i32
    %c0_i32_0 = arith.constant 0 : i32
    return %arg0, %c0_i32 : i32, i32
  }
}

</mosaic_0001>

<llo_original>
// kernel: tpu_custom_call.1
$region0: #{tpu_custom_call.1}
  #allocation0 [shape = 'u32[]', space=smem, size = 0x4, offset = 0x4, fixed_abs, tag = 'smem constant byte address 0x4 - core index']
  #allocation1 [shape = 'u32[144,128]{1,0:T(1,128)}', space=vmem, size = 0x12000, scoped, tag = 'internal scratch']
  %s0 = inlined_call_operand.hbm [shape: f32[17], index: 0, kind: input, shape index: {}]
  %s1 = inlined_call_operand.hbm [shape: f32[16,128], index: 1, kind: input, shape index: {}]
  %s2 = inlined_call_operand.hbm [shape: f32[16,128], index: 2, kind: output, shape index: {}]
  %s3 = sld [smem:[#allocation0]]
  $region26: #{tpu_custom_call.1} parent=0
    _
  %s5 = ssub.s32 1, %s3
  %s6 = scalar_select 0, %s5, %s3
  $region1: #{tpu_custom_call.1} parent=0
    #allocation2 [shape = 'u8[512]{0}', space=smem, size = 0x200, scoped, tag = 'input window, operand 0, single buffered']
    #allocation3 [shape = 's32[1]{0}', space=sflag, size = 0x4, scoped, tag = 'scoped memory for tpu_custom_call.1']
    #allocation4 [shape = 's32[1]{0}', space=sflag, size = 0x4, scoped, tag = 'scoped memory for tpu_custom_call.1']
    #allocation5 [shape = 's32[1]{0}', space=sflag, size = 0x4, scoped, tag = 'scoped memory for tpu_custom_call.1']
    #allocation6 [shape = 'u8[8192]{0}', space=vmem, size = 0x2000, scoped, tag = 'input window, operand 1, single buffered']
    #allocation7 [shape = 'u8[8192]{0}', space=vmem, size = 0x2000, scoped, tag = 'output window, operand 0, single buffered']
    %7 = vsyncpa [#allocation5], 0
    %8 = vsyncpa [#allocation3], 0
    %9 = vsyncpa [#allocation4], 0
    // Predicated region
    $region2: #{tpu_custom_call.1} parent=1 // pred_check
      _
    $region3: #{tpu_custom_call.1} parent=1 // pred_check_branch
      %11 = sbr.rel (0) target = $region5
    $region4: #{tpu_custom_call.1} parent=1 // pred_region
      %s13 = ssub.s32 16, 16
      %14 = vsyncadd [#allocation5], %s13
      %17 = dma.hbm_to_smem %s0, 16, [#allocation2], [#allocation5]
    $region5: #{tpu_custom_call.1} parent=1 // pred_fallthru
      _
    // Predicated region
    $region6: #{tpu_custom_call.1} parent=1 // pred_check
      _
    $region7: #{tpu_custom_call.1} parent=1 // pred_check_branch
      %19 = sbr.rel (0) target = $region9
    $region8: #{tpu_custom_call.1} parent=1 // pred_region
      %s21 = ssub.s32 256, 256
      %22 = vsyncadd [#allocation3], %s21
      %s23 = sshll.u32 [#allocation6], 4
      %s24 = int_to_ptr.vmem [resolvable:$true] %s23
      %29 = dma.hbm_to_vmem [thread:$0]  %s1, 256, %s24, [#allocation3], 128, 128, 8
    $region9: #{tpu_custom_call.1} parent=1 // pred_fallthru
      _
    // Predicated region
    $region10: #{tpu_custom_call.1} parent=1 // pred_check
      _
    $region11: #{tpu_custom_call.1} parent=1 // pred_check_branch
      %31 = sbr.rel (0) target = $region13
    $region12: #{tpu_custom_call.1} parent=1 // pred_region
      %32 = dma.done [#allocation5], 16
    $region13: #{tpu_custom_call.1} parent=1 // pred_fallthru
      _
    // Predicated region
    $region14: #{tpu_custom_call.1} parent=1 // pred_check
      _
    $region15: #{tpu_custom_call.1} parent=1 // pred_check_branch
      %34 = sbr.rel (0) target = $region17
    $region16: #{tpu_custom_call.1} parent=1 // pred_region
      %35 = dma.done [#allocation3], 256
    $region17: #{tpu_custom_call.1} parent=1 // pred_fallthru
      _
    %36 = sfence
    %v37 = vld [vmem:[#allocation6] sm:$0xff]
    %v38 = vld [vmem:[#allocation6 + $0x8] sm:$0xff]
    %s39 = sld [smem:[#allocation2 + $0x10]]
    %s40 = sld [smem:[#allocation2]]
    %s41 = sld [smem:[#allocation2 + $0x1]]
    %s42 = sld [smem:[#allocation2 + $0x2]]
    %s43 = sld [smem:[#allocation2 + $0x3]]
    %s44 = sld [smem:[#allocation2 + $0x4]]
    %s45 = sld [smem:[#allocation2 + $0x5]]
    %s46 = sld [smem:[#allocation2 + $0x6]]
    %s47 = sld [smem:[#allocation2 + $0x7]]
    %s48 = sld [smem:[#allocation2 + $0x8]]
    %s49 = sld [smem:[#allocation2 + $0x9]]
    %s50 = sld [smem:[#allocation2 + $0xa]]
    %s51 = sld [smem:[#allocation2 + $0xb]]
    %s52 = sld [smem:[#allocation2 + $0xc]]
    %s53 = sld [smem:[#allocation2 + $0xd]]
    %s54 = sld [smem:[#allocation2 + $0xe]]
    %s55 = sld [smem:[#allocation2 + $0xf]]
    %vm56 = vcmp.ge.f32.partialorder %v37, 0.25
    %vm57 = vcmp.ge.f32.partialorder %v38, 0.25
    %v58 = vsel %vm56, 0.25, 0.0
    %v59 = vsel %vm57, 0.25, 0.0
    %v60 = vstv %s44
    %v61 = vstv %s40
    %v62 = vsel %vm56, %v60, %v61
    %v63 = vsel %vm57, %v60, %v61
    %v64 = vstv %s45
    %v65 = vstv %s41
    %v66 = vsel %vm56, %v64, %v65
    %v67 = vsel %vm57, %v64, %v65
    %v68 = vstv %s46
    %v69 = vstv %s42
    %v70 = vsel %vm56, %v68, %v69
    %v71 = vsel %vm57, %v68, %v69
    %v72 = vstv %s47
    %v73 = vstv %s43
    %v74 = vsel %vm56, %v72, %v73
    %v75 = vsel %vm57, %v72, %v73
    %vm76 = vcmp.ge.f32.partialorder %v37, 0.5
    %vm77 = vcmp.ge.f32.partialorder %v38, 0.5
    %v78 = vsel %vm76, 0.5, %v58
    %v79 = vsel %vm77, 0.5, %v59
    %v80 = vstv %s48
    %v81 = vsel %vm76, %v80, %v62
    %v82 = vsel %vm77, %v80, %v63
    %v83 = vstv %s49
    %v84 = vsel %vm76, %v83, %v66
    %v85 = vsel %vm77, %v83, %v67
    %v86 = vstv %s50
    %v87 = vsel %vm76, %v86, %v70
    %v88 = vsel %vm77, %v86, %v71
    %v89 = vstv %s51
    %v90 = vsel %vm76, %v89, %v74
    %v91 = vsel %vm77, %v89, %v75
    %vm92 = vcmp.ge.f32.partialorder %v37, 0.75
    %vm93 = vcmp.ge.f32.partialorder %v38, 0.75
    %v94 = vsel %vm92, 0.75, %v78
    %v95 = vsel %vm93, 0.75, %v79
    %v96 = vstv %s52
    %v97 = vsel %vm92, %v96, %v81
    %v98 = vsel %vm93, %v96, %v82
    %v99 = vstv %s53
    %v100 = vsel %vm92, %v99, %v84
    %v101 = vsel %vm93, %v99, %v85
    %v102 = vstv %s54
    %v103 = vsel %vm92, %v102, %v87
    %v104 = vsel %vm93, %v102, %v88
    %v105 = vstv %s55
    %v106 = vsel %vm92, %v105, %v90
    %v107 = vsel %vm93, %v105, %v91
    %v108 = vsub.f32 %v37, %v94
    %v109 = vsub.f32 %v38, %v95
    %v110 = vmul.f32 %v106, %v108
    %v111 = vmul.f32 %v107, %v109
    %v112 = vadd.f32 %v110, %v103
    %v113 = vadd.f32 %v111, %v104
    %v114 = vmul.f32 %v112, %v108
    %v115 = vmul.f32 %v113, %v109
    %v116 = vadd.f32 %v114, %v100
    %v117 = vadd.f32 %v115, %v101
    %v118 = vmul.f32 %v116, %v108
    %v119 = vmul.f32 %v117, %v109
    %v120 = vadd.f32 %v118, %v97
    %v121 = vadd.f32 %v119, %v98
    %vm122 = vcmp.ge.f32.partialorder %v37, 0.0
    %vm123 = vcmp.ge.f32.partialorder %v38, 0.0
    %vm124 = vcmp.lt.f32.partialorder %v37, 1.0
    %vm125 = vcmp.lt.f32.partialorder %v38, 1.0
    %vm126 = vmand %vm122, %vm124
    %vm127 = vmand %vm123, %vm125
    %v128 = vsel %vm126, %v120, 0.0
    %v129 = vsel %vm127, %v121, 0.0
    %vm130 = vcmp.eq.f32.partialorder %v37, 1.0
    %vm131 = vcmp.eq.f32.partialorder %v38, 1.0
    %v132 = vstv %s39
    %v133 = vsel %vm130, %v132, %v128
    %v134 = vsel %vm131, %v132, %v129
    %135 = vst [vmem:[#allocation7] sm:$0xff] %v133
    %136 = vst [vmem:[#allocation7 + $0x8] sm:$0xff] %v134
    // Predicated region
    $region18: #{tpu_custom_call.1} parent=1 // pred_check
      _
    $region19: #{tpu_custom_call.1} parent=1 // pred_check_branch
      %138 = sbr.rel (0) target = $region21
    $region20: #{tpu_custom_call.1} parent=1 // pred_region
      %s140 = ssub.s32 256, 256
      %141 = vsyncadd [#allocation4], %s140
      %s142 = sshll.u32 [#allocation7], 4
      %s143 = int_to_ptr.vmem [resolvable:$true] %s142
      %148 = dma.vmem_to_hbm [thread:$0]  %s143, 256, %s2, [#allocation4], 128, 128, 8
    $region21: #{tpu_custom_call.1} parent=1 // pred_fallthru
      _
    // Predicated region
    $region22: #{tpu_custom_call.1} parent=1 // pred_check
      _
    $region23: #{tpu_custom_call.1} parent=1 // pred_check_branch
      %150 = sbr.rel (0) target = $region25
    $region24: #{tpu_custom_call.1} parent=1 // pred_region
      %151 = dma.done [#allocation4], 256
    $region25: #{tpu_custom_call.1} parent=1 // pred_fallthru
      _
    %152 = vsyncpa [#allocation3], 1
    %153 = vsyncpa [#allocation4], 1
    %154 = vsyncpa [#allocation5], 1

</llo_original>
